<compile_context>
chip_gen: v6e
topology: v6e:2x2x1
jax: 0.10.0
libtpu: 0.0.40
codegen_flags: <defaults>
</compile_context>

<pallas_src>
import numpy as np
import jax
import jax.numpy as jnp
from jax.experimental import pallas as pl
from jax.experimental.pallas import tpu as pltpu

LANE = 128       # lane width: feature dims padded to a multiple of this
SUBL = 16        # node-tile granularity (bf16 sublane packing)


def _round_up(n, m):
    return ((n + m - 1) // m) * m


def _pad2(a, rows, cols):
    """Zero-pad a 2-D array up to (rows, cols)."""
    return jnp.zeros((rows, cols), a.dtype).at[: a.shape[0], : a.shape[1]].set(a)


def _sigmoid(x):
    # Exact identity sigma(x) = 0.5*(1 + tanh(x/2)): one EUP op, no exp+divide.
    return 0.5 * jnp.tanh(0.5 * x) + 0.5


def _vmem_capacity_bytes():
    """Physical VMEM per core (128 MiB v5e/v6e, 64 MiB v7x), with fallback."""
    try:
        cap = int(pltpu.get_tpu_info().vmem_capacity_bytes)
    except Exception:
        cap = 64 * 1024 * 1024
    return max(min(cap, 128 * 1024 * 1024), 32 * 1024 * 1024)


# ----------------------------------------------------------------------------
# Pallas kernel: one SAGEConv(aggr='lstm') layer (+ optional relu / log_softmax)
# ----------------------------------------------------------------------------
def _make_sage_kernel(T, tile_n, H, G_blk, GW, F_pad, out_valid,
                      apply_relu, apply_log_softmax):
    def kernel(xd_ref, xt_ref, wih_ref, whh_ref, b_ref, wl_ref, wr_ref, bl_ref,
               out_ref, gx_ref):
        # ---- hoisted input projection: ONE MXU matmul over all T steps ------
        xd = xd_ref[...]                                      # [T, tn, F_pad] bf16
        xd_flat = xd.reshape(T * tile_n, F_pad)               # [T*tn, F_pad]
        gx_ref[...] = (
            jnp.dot(xd_flat, wih_ref[...], preferred_element_type=jnp.float32)
            + b_ref[...]).astype(gx_ref.dtype)                # [T*tn, GW] bf16

        # ---- LSTM recurrence over the T (zero-padded) neighbor slots --------
        h0 = jnp.zeros((tile_n, H), jnp.float32)
        c0 = jnp.zeros((tile_n, H), jnp.float32)

        def step(t, carry):
            h, c = carry
            row = pl.multiple_of(t * tile_n, SUBL)
            gates = (gx_ref[pl.ds(row, tile_n), :].astype(jnp.float32)
                     + jnp.dot(h.astype(jnp.bfloat16), whh_ref[...],
                               preferred_element_type=jnp.float32))  # [tn, GW]
            # Two full-width EUP calls; gates extracted as true-width slices.
            sig = _sigmoid(gates)
            tah = jnp.tanh(gates)
            i_g = sig[:, 0 * G_blk:0 * G_blk + H]
            f_g = sig[:, 1 * G_blk:1 * G_blk + H]
            g_g = tah[:, 2 * G_blk:2 * G_blk + H]
            o_g = sig[:, 3 * G_blk:3 * G_blk + H]
            c = f_g * c + i_g * g_g
            h = o_g * jnp.tanh(c)
            return h, c

        h, _ = jax.lax.fori_loop(0, T, step, (h0, c0))

        # ---- out = lin_l(aggr) + bias + lin_r(x_target) ----------------------
        # NOTE: could be fused into one K=(F_pad+H) matmul via a lane concat;
        # kept as two lane-aligned dots for robustness (see header TODOs).
        out = (jnp.dot(h.astype(jnp.bfloat16), wl_ref[...],
                       preferred_element_type=jnp.float32)
               + bl_ref[...]
               + jnp.dot(xt_ref[...], wr_ref[...],
                         preferred_element_type=jnp.float32))  # [tn, O_pad]
        if apply_relu:
            out = jnp.maximum(out, 0.0)
        if apply_log_softmax:
            # Mask the zero-padded output columns out of the softmax.
            col = jax.lax.broadcasted_iota(jnp.int32, out.shape, 1)
            out = jnp.where(col < out_valid, out, -1e30)
            m = jnp.max(out, axis=-1, keepdims=True)
            y = out - m
            out = y - jnp.log(jnp.sum(jnp.exp(y), axis=-1, keepdims=True))
        out_ref[...] = out.astype(out_ref.dtype)

    return kernel


def _choose_tile_n(n_dst, T, p, out_bytes, budget_bytes):
    """Largest node tile (multiple of 16, <=128) under the VMEM budget, while
    keeping >=2 parallel grid tiles when the batch allows (v7x: 2 TCs)."""
    F_pad, H, GW, O_pad = p["F_pad"], p["H"], p["GW"], p["O_pad"]
    n_min = _round_up(max(n_dst, 1), SUBL)
    tile = min(n_min, 128)
    if n_min >= 2 * SUBL:
        tile = min(tile, _round_up((n_dst + 1) // 2, SUBL))

    # Double-buffered weight / bias blocks (conservative: not Buffered(1)).
    weight_bytes = 2 * (F_pad * GW * 2 + H * GW * 2 + H * O_pad * 2
                        + F_pad * O_pad * 2 + GW * 4 + O_pad * 4)

    def vmem_bytes(t):
        return (2 * T * t * F_pad * 2        # neighbor block, double-buffered bf16
                + 2 * t * F_pad * 2          # x_target block, double-buffered bf16
                + T * t * GW * 2             # hoisted-gate scratch (bf16)
                + 2 * t * O_pad * out_bytes  # output block, double-buffered
                + weight_bytes)

    while tile > SUBL and vmem_bytes(tile) > budget_bytes:
        tile -= SUBL
    return tile


def sage_conv_lstm(x_dense, x_target, p, *, tile_n, apply_relu,
                   apply_log_softmax, out_dtype, vmem_limit_bytes):
    """One SAGEConv(aggr='lstm') layer as a single pallas_call, tiled over dst nodes.

    x_dense:  [T, n_pad, F_pad] bf16 (time-major dense neighbor batch)
    x_target: [n_pad, F_pad]    bf16
    returns:  [n_pad, O_pad]    out_dtype (padded cols exactly 0 / masked)
    """
    T, n_pad, F_pad = x_dense.shape
    H, G_blk, GW, O_pad = p["H"], p["G_blk"], p["GW"], p["O_pad"]
    assert n_pad % tile_n == 0

    kernel = _make_sage_kernel(T, tile_n, H, G_blk, GW, F_pad, p["out_ch"],
                               apply_relu, apply_log_softmax)
    return pl.pallas_call(
        kernel,
        out_shape=jax.ShapeDtypeStruct((n_pad, O_pad), out_dtype),
        grid_spec=pltpu.PrefetchScalarGridSpec(
            num_scalar_prefetch=0,
            grid=(n_pad // tile_n,),
            in_specs=[
                pl.BlockSpec((T, tile_n, F_pad), lambda i: (0, i, 0)),  # neighbors
                pl.BlockSpec((tile_n, F_pad), lambda i: (i, 0)),        # x_target
                pl.BlockSpec((F_pad, GW), lambda i: (0, 0)),            # W_ih^T (gate-packed)
                pl.BlockSpec((H, GW), lambda i: (0, 0)),                # W_hh^T (gate-packed)
                pl.BlockSpec((1, GW), lambda i: (0, 0)),                # b_ih + b_hh
                pl.BlockSpec((H, O_pad), lambda i: (0, 0)),             # lin_l W^T
                pl.BlockSpec((F_pad, O_pad), lambda i: (0, 0)),         # lin_r W^T
                pl.BlockSpec((1, O_pad), lambda i: (0, 0)),             # lin_l bias
            ],
            out_specs=pl.BlockSpec((tile_n, O_pad), lambda i: (i, 0)),
            scratch_shapes=[pltpu.VMEM((T * tile_n, GW), jnp.bfloat16)],
        ),
        compiler_params=pltpu.CompilerParams(
            dimension_semantics=("parallel",),
            vmem_limit_bytes=vmem_limit_bytes,
        ),
    )(x_dense, x_target, p["wih"], p["whh"], p["b"], p["wl"], p["wr"], p["bl"])


# ----------------------------------------------------------------------------
# Parameter init (PyTorch layout -> padded, gate-packed, MXU-friendly layout)
# ----------------------------------------------------------------------------
def init_sage_conv(key, in_ch, out_ch):
    H = in_ch                                   # LSTM hidden == in_channels (PyG)
    F_pad = _round_up(in_ch, LANE)
    O_pad = _round_up(out_ch, LANE)
    # Tight gate packing: all four gates in one 128-lane block when possible.
    G_blk = H if 4 * H <= LANE else _round_up(H, LANE)
    GW = _round_up(4 * G_blk, LANE)

    ks = jax.random.split(key, 7)
    s = 0.1
    # PyTorch-shaped weights (unpadded), gate order (i, f, g, o).
    w_ih = jax.random.normal(ks[0], (4 * H, in_ch), jnp.float32) * s   # [4H, F]
    w_hh = jax.random.normal(ks[1], (4 * H, H), jnp.float32) * s       # [4H, H]
    b_ih = jax.random.normal(ks[2], (4 * H,), jnp.float32) * s
    b_hh = jax.random.normal(ks[3], (4 * H,), jnp.float32) * s
    w_l = jax.random.normal(ks[4], (out_ch, H), jnp.float32) * s       # lin_l.weight
    b_l = jax.random.normal(ks[5], (out_ch,), jnp.float32) * s         # lin_l.bias
    w_r = jax.random.normal(ks[6], (out_ch, in_ch), jnp.float32) * s   # lin_r.weight

    wih = jnp.zeros((F_pad, GW), jnp.float32)
    whh = jnp.zeros((H, GW), jnp.float32)
    b = jnp.zeros((1, GW), jnp.float32)
    bsum = b_ih + b_hh
    for g in range(4):
        wih = wih.at[:in_ch, g * G_blk:g * G_blk + H].set(w_ih[g * H:(g + 1) * H, :].T)
        whh = whh.at[:, g * G_blk:g * G_blk + H].set(w_hh[g * H:(g + 1) * H, :].T)
        b = b.at[0, g * G_blk:g * G_blk + H].set(bsum[g * H:(g + 1) * H])

    return dict(
        out_ch=out_ch, H=H, G_blk=G_blk, GW=GW, F_pad=F_pad, O_pad=O_pad,
        wih=wih.astype(jnp.bfloat16),
        whh=whh.astype(jnp.bfloat16),
        b=b,                                                    # f32 (post-matmul add)
        wl=_pad2(w_l.T, H, O_pad).astype(jnp.bfloat16),
        wr=_pad2(w_r.T, F_pad, O_pad).astype(jnp.bfloat16),
        bl=_pad2(b_l[None, :], 1, O_pad),                       # f32
    )


# ----------------------------------------------------------------------------
# Host-side glue: dense neighbor batch (PyG to_dense_batch), time-major layout
# ----------------------------------------------------------------------------
def to_dense_batch_time_major(x, src, dst, n_dst, n_pad, T):
    """Group messages x[src] by destination (edges sorted by dst), zero-padded.

    Returns [T, n_pad, F]  (neighbor slot, dst node, feature)."""
    deg = np.bincount(dst, minlength=n_dst)
    if len(dst):
        pos = np.concatenate([np.arange(d, dtype=np.int32) for d in deg])
    else:
        pos = np.zeros(0, np.int32)
    dense = jnp.zeros((T, n_pad, x.shape[1]), x.dtype)
    if len(dst):
        dense = dense.at[jnp.asarray(pos, jnp.int32),
                         jnp.asarray(dst, jnp.int32)].set(
            x[jnp.asarray(src, jnp.int32)])
    return dense


class SAGE:
    """3-layer SAGE with LSTM aggregation; forward matches the PyTorch module (eval)."""

    def __init__(self, in_channels, hidden_channels, out_channels, key):
        k0, k1, k2 = jax.random.split(key, 3)
        self.num_layers = 3
        self.out_channels = out_channels
        self.params = [
            init_sage_conv(k0, in_channels, hidden_channels),
            init_sage_conv(k1, hidden_channels, hidden_channels),
            init_sage_conv(k2, hidden_channels, out_channels),
        ]
        self._vmem_cap = _vmem_capacity_bytes()

    def forward(self, x, adjs):
        # adjs: list of ((src, dst), (n_src, n_dst)); edges sorted by dst
        # (required by PyG's aggr='lstm').
        budget = max(self._vmem_cap // 2, 16 * 1024 * 1024)
        vmem_limit = max(self._vmem_cap * 3 // 4, 32 * 1024 * 1024)
        x = _pad2(x, x.shape[0], self.params[0]["F_pad"]).astype(jnp.bfloat16)
        for i, ((src, dst), (n_src, n_dst)) in enumerate(adjs):
            p = self.params[i]
            last = i == self.num_layers - 1
            # T must be the exact max #neighbors (padded LSTM steps are part of
            # the reference semantics, so T cannot be bucketed/rounded).
            T = int(np.bincount(dst, minlength=n_dst).max()) if len(dst) else 1
            T = max(T, 1)
            out_dtype = jnp.float32 if last else jnp.bfloat16
            tile_n = _choose_tile_n(n_dst, T, p, np.dtype(out_dtype).itemsize, budget)
            n_pad = _round_up(n_dst, tile_n)
            x_dense = to_dense_batch_time_major(x, src, dst, n_dst, n_pad, T)
            x_target = _pad2(x[:n_dst], n_pad, p["F_pad"])
            out = sage_conv_lstm(
                x_dense, x_target, p,
                tile_n=tile_n,
                apply_relu=not last,            # ReLU between layers
                apply_log_softmax=last,         # final x.log_softmax(dim=-1)
                out_dtype=out_dtype,            # bf16 inter-layer, f32 final
                vmem_limit_bytes=vmem_limit,
            )                                    # [n_pad, O_pad]
            # dropout(p=0.5, training=False) -> identity
            x = out[:n_dst]                      # padded feature cols stay exactly 0
        return x[:, :self.out_channels]


# ----------------------------------------------------------------------------
if __name__ == "__main__":
    key = jax.random.PRNGKey(0)
    in_ch, hidden_ch, out_ch = 16, 32, 8
    # Nodes at each hop level (NeighborSampler-style nesting): src of layer i is
    # N[i]; its targets are the first N[i+1] of those nodes.
    N = [64, 32, 16, 8]

    x = jax.random.normal(jax.random.fold_in(key, 123), (N[0], in_ch), jnp.float32)

    rng = np.random.RandomState(0)
    adjs = []
    for layer in range(3):
        n_src, n_dst = N[layer], N[layer + 1]
        deg = rng.randint(2, 6, size=n_dst)                  # neighbors per dst node
        dst = np.repeat(np.arange(n_dst), deg)               # sorted by destination
        src = np.concatenate([rng.randint(0, n_src, size=d) for d in deg])
        adjs.append(((src, dst), (n_src, n_dst)))

    model = SAGE(in_ch, hidden_ch, out_ch, key)
    out = model.forward(x, adjs)                             # [8, out_ch] log-probs
    jax.block_until_ready(out)
    assert out.shape == (N[-1], out_ch)
    assert bool(jnp.all(jnp.isfinite(out)))
    print("KERNEL_OK")
</pallas_src>

<mosaic_0001>
module attributes {stable_mosaic.version = 11 : i64} {
  func.func @kernel(%arg0: i32, %arg1: memref<5x16x128xbf16, #tpu.memory_space<vmem>>, %arg2: memref<16x128xbf16, #tpu.memory_space<vmem>>, %arg3: memref<128x128xbf16, #tpu.memory_space<vmem>>, %arg4: memref<16x128xbf16, #tpu.memory_space<vmem>>, %arg5: memref<1x128xf32, #tpu.memory_space<vmem>>, %arg6: memref<16x128xbf16, #tpu.memory_space<vmem>>, %arg7: memref<128x128xbf16, #tpu.memory_space<vmem>>, %arg8: memref<1x128xf32, #tpu.memory_space<vmem>>, %arg9: memref<16x128xbf16, #tpu.memory_space<vmem>>, %arg10: memref<80x128xbf16, #tpu.memory_space<vmem>>) attributes {dimension_semantics = [#tpu.dimension_semantics<parallel>], iteration_bounds = array<i64: 2>, scalar_prefetch = 0 : i64, scratch_operands = 1 : i64, tpu.core_type = #tpu.core_type<tc>, window_params = [{transform_indices = @transform_0, window_bounds = array<i64: 5, 16, 128>}, {transform_indices = @transform_1, window_bounds = array<i64: 16, 128>}, {pipeline_mode = #tpu.pipeline_mode<synchronous>, transform_indices = @transform_2, window_bounds = array<i64: 128, 128>}, {pipeline_mode = #tpu.pipeline_mode<synchronous>, transform_indices = @transform_3, window_bounds = array<i64: 16, 128>}, {pipeline_mode = #tpu.pipeline_mode<synchronous>, transform_indices = @transform_4, window_bounds = array<i64: 1, 128>}, {pipeline_mode = #tpu.pipeline_mode<synchronous>, transform_indices = @transform_5, window_bounds = array<i64: 16, 128>}, {pipeline_mode = #tpu.pipeline_mode<synchronous>, transform_indices = @transform_6, window_bounds = array<i64: 128, 128>}, {pipeline_mode = #tpu.pipeline_mode<synchronous>, transform_indices = @transform_7, window_bounds = array<i64: 1, 128>}, {transform_indices = @transform_8, window_bounds = array<i64: 16, 128>}]} {
    %c0 = arith.constant 0 : index
    %c0_0 = arith.constant 0 : index
    %c0_1 = arith.constant 0 : index
    %0 = vector.load %arg1[%c0, %c0_0, %c0_1] : memref<5x16x128xbf16, #tpu.memory_space<vmem>>, vector<5x16x128xbf16>
    %1 = vector.shape_cast %0 : vector<5x16x128xbf16> to vector<80x128xbf16>
    %c0_2 = arith.constant 0 : index
    %c0_3 = arith.constant 0 : index
    %2 = vector.load %arg3[%c0_2, %c0_3] : memref<128x128xbf16, #tpu.memory_space<vmem>>, vector<128x128xbf16>
    %cst = arith.constant dense<0.000000e+00> : vector<80x128xf32>
    %3 = tpu.matmul %1, %2, %cst {dimension_numbers = #tpu.dot_dimension_numbers<[1], [0], [0], [1], [0, 0, 1, 1], [], []>} : vector<80x128xbf16>, vector<128x128xbf16>, vector<80x128xf32> -> vector<80x128xf32>
    %c0_4 = arith.constant 0 : index
    %c0_5 = arith.constant 0 : index
    %4 = vector.load %arg5[%c0_4, %c0_5] : memref<1x128xf32, #tpu.memory_space<vmem>>, vector<1x128xf32>
    %5 = vector.broadcast %4 : vector<1x128xf32> to vector<80x128xf32>
    %6 = arith.addf %3, %5 : vector<80x128xf32>
    %7 = arith.truncf %6 : vector<80x128xf32> to vector<80x128xbf16>
    %c0_6 = arith.constant 0 : index
    %c0_7 = arith.constant 0 : index
    %8 = vector.load %arg10[%c0_6, %c0_7] : memref<80x128xbf16, #tpu.memory_space<vmem>>, vector<80x128xbf16>
    tpu.vector_store %arg10[%c0_6, %c0_7], %7 {strides = array<i32>} : memref<80x128xbf16, #tpu.memory_space<vmem>>, vector<80x128xbf16>,
    %cst_8 = arith.constant 0.000000e+00 : f32
    %9 = vector.broadcast %cst_8 : f32 to vector<16x16xf32>
    %cst_9 = arith.constant 0.000000e+00 : f32
    %10 = vector.broadcast %cst_9 : f32 to vector<16x16xf32>
    %c0_i32 = arith.constant 0 : i32
    %c5_i32 = arith.constant 5 : i32
    %11 = arith.addi %c0_i32, %c5_i32 : i32
    %c1_i32 = arith.constant 1 : i32
    %12:2 = scf.for %arg11 = %c0_i32 to %11 step %c1_i32 iter_args(%arg12 = %9, %arg13 = %10) -> (vector<16x16xf32>, vector<16x16xf32>)  : i32 {
      %c16_i32 = arith.constant 16 : i32
      %27 = arith.muli %arg11, %c16_i32 : i32
      %28 = tpu.assume_multiple %27, 16 : i32
      %29 = arith.index_cast %28 : i32 to index
      %c0_24 = arith.constant 0 : index
      %30 = vector.load %arg10[%29, %c0_24] : memref<80x128xbf16, #tpu.memory_space<vmem>>, vector<16x128xbf16>
      %31 = arith.extf %30 : vector<16x128xbf16> to vector<16x128xf32>
      %32 = arith.truncf %arg12 : vector<16x16xf32> to vector<16x16xbf16>
      %c0_25 = arith.constant 0 : index
      %c0_26 = arith.constant 0 : index
      %33 = vector.load %arg4[%c0_25, %c0_26] : memref<16x128xbf16, #tpu.memory_space<vmem>>, vector<16x128xbf16>
      %cst_27 = arith.constant dense<0.000000e+00> : vector<16x128xf32>
      %34 = tpu.matmul %32, %33, %cst_27 {dimension_numbers = #tpu.dot_dimension_numbers<[1], [0], [0], [1], [0, 0, 1, 1], [], []>} : vector<16x16xbf16>, vector<16x128xbf16>, vector<16x128xf32> -> vector<16x128xf32>
      %35 = arith.addf %31, %34 : vector<16x128xf32>
      %cst_28 = arith.constant 5.000000e-01 : f32
      %36 = vector.broadcast %cst_28 : f32 to vector<16x128xf32>
      %37 = arith.mulf %36, %35 : vector<16x128xf32>
      %38 = math.tanh %37 : vector<16x128xf32>
      %cst_29 = arith.constant 5.000000e-01 : f32
      %39 = vector.broadcast %cst_29 : f32 to vector<16x128xf32>
      %40 = arith.mulf %39, %38 : vector<16x128xf32>
      %cst_30 = arith.constant 5.000000e-01 : f32
      %41 = vector.broadcast %cst_30 : f32 to vector<16x128xf32>
      %42 = arith.addf %40, %41 : vector<16x128xf32>
      %43 = math.tanh %35 : vector<16x128xf32>
      %44 = vector.extract_strided_slice %42 {offsets = [0, 0], sizes = [16, 16], strides = [1, 1]} : vector<16x128xf32> to vector<16x16xf32>
      %45 = vector.extract_strided_slice %42 {offsets = [0, 16], sizes = [16, 16], strides = [1, 1]} : vector<16x128xf32> to vector<16x16xf32>
      %46 = vector.extract_strided_slice %43 {offsets = [0, 32], sizes = [16, 16], strides = [1, 1]} : vector<16x128xf32> to vector<16x16xf32>
      %47 = vector.extract_strided_slice %42 {offsets = [0, 48], sizes = [16, 16], strides = [1, 1]} : vector<16x128xf32> to vector<16x16xf32>
      %48 = arith.mulf %45, %arg13 : vector<16x16xf32>
      %49 = arith.mulf %44, %46 : vector<16x16xf32>
      %50 = arith.addf %48, %49 : vector<16x16xf32>
      %51 = math.tanh %50 : vector<16x16xf32>
      %52 = arith.mulf %47, %51 : vector<16x16xf32>
      scf.yield %52, %50 : vector<16x16xf32>, vector<16x16xf32>
    }
    %c5_i32_10 = arith.constant 5 : i32
    %13 = arith.truncf %12#0 : vector<16x16xf32> to vector<16x16xbf16>
    %c0_11 = arith.constant 0 : index
    %c0_12 = arith.constant 0 : index
    %14 = vector.load %arg6[%c0_11, %c0_12] : memref<16x128xbf16, #tpu.memory_space<vmem>>, vector<16x128xbf16>
    %cst_13 = arith.constant dense<0.000000e+00> : vector<16x128xf32>
    %15 = tpu.matmul %13, %14, %cst_13 {dimension_numbers = #tpu.dot_dimension_numbers<[1], [0], [0], [1], [0, 0, 1, 1], [], []>} : vector<16x16xbf16>, vector<16x128xbf16>, vector<16x128xf32> -> vector<16x128xf32>
    %c0_14 = arith.constant 0 : index
    %c0_15 = arith.constant 0 : index
    %16 = vector.load %arg8[%c0_14, %c0_15] : memref<1x128xf32, #tpu.memory_space<vmem>>, vector<1x128xf32>
    %17 = vector.broadcast %16 : vector<1x128xf32> to vector<16x128xf32>
    %18 = arith.addf %15, %17 : vector<16x128xf32>
    %c0_16 = arith.constant 0 : index
    %c0_17 = arith.constant 0 : index
    %19 = vector.load %arg2[%c0_16, %c0_17] : memref<16x128xbf16, #tpu.memory_space<vmem>>, vector<16x128xbf16>
    %c0_18 = arith.constant 0 : index
    %c0_19 = arith.constant 0 : index
    %20 = vector.load %arg7[%c0_18, %c0_19] : memref<128x128xbf16, #tpu.memory_space<vmem>>, vector<128x128xbf16>
    %cst_20 = arith.constant dense<0.000000e+00> : vector<16x128xf32>
    %21 = tpu.matmul %19, %20, %cst_20 {dimension_numbers = #tpu.dot_dimension_numbers<[1], [0], [0], [1], [0, 0, 1, 1], [], []>} : vector<16x128xbf16>, vector<128x128xbf16>, vector<16x128xf32> -> vector<16x128xf32>
    %22 = arith.addf %18, %21 : vector<16x128xf32>
    %cst_21 = arith.constant 0.000000e+00 : f32
    %23 = vector.broadcast %cst_21 : f32 to vector<16x128xf32>
    %24 = arith.maximumf %22, %23 : vector<16x128xf32>
    %25 = arith.truncf %24 : vector<16x128xf32> to vector<16x128xbf16>
    %c0_22 = arith.constant 0 : index
    %c0_23 = arith.constant 0 : index
    %26 = vector.load %arg9[%c0_22, %c0_23] : memref<16x128xbf16, #tpu.memory_space<vmem>>, vector<16x128xbf16>
    tpu.vector_store %arg9[%c0_22, %c0_23], %25 {strides = array<i32>} : memref<16x128xbf16, #tpu.memory_space<vmem>>, vector<16x128xbf16>,
    return
  }
  func.func @transform_0(%arg0: i32) -> (i32, i32, i32) {
    %c0_i32 = arith.constant 0 : i32
    %c0_i32_0 = arith.constant 0 : i32
    %c0_i32_1 = arith.constant 0 : i32
    return %c0_i32, %arg0, %c0_i32_0 : i32, i32, i32
  }
  func.func @transform_1(%arg0: i32) -> (i32, i32) {
    %c0_i32 = arith.constant 0 : i32
    %c0_i32_0 = arith.constant 0 : i32
    return %arg0, %c0_i32 : i32, i32
  }
  func.func @transform_2(%arg0: i32) -> (i32, i32) {
    %c0_i32 = arith.constant 0 : i32
    %c0_i32_0 = arith.constant 0 : i32
    %c0_i32_1 = arith.constant 0 : i32
    return %c0_i32, %c0_i32_0 : i32, i32
  }
  func.func @transform_3(%arg0: i32) -> (i32, i32) {
    %c0_i32 = arith.constant 0 : i32
    %c0_i32_0 = arith.constant 0 : i32
    %c0_i32_1 = arith.constant 0 : i32
    return %c0_i32, %c0_i32_0 : i32, i32
  }
  func.func @transform_4(%arg0: i32) -> (i32, i32) {
    %c0_i32 = arith.constant 0 : i32
    %c0_i32_0 = arith.constant 0 : i32
    %c0_i32_1 = arith.constant 0 : i32
    return %c0_i32, %c0_i32_0 : i32, i32
  }
  func.func @transform_5(%arg0: i32) -> (i32, i32) {
    %c0_i32 = arith.constant 0 : i32
    %c0_i32_0 = arith.constant 0 : i32
    %c0_i32_1 = arith.constant 0 : i32
    return %c0_i32, %c0_i32_0 : i32, i32
  }
  func.func @transform_6(%arg0: i32) -> (i32, i32) {
    %c0_i32 = arith.constant 0 : i32
    %c0_i32_0 = arith.constant 0 : i32
    %c0_i32_1 = arith.constant 0 : i32
    return %c0_i32, %c0_i32_0 : i32, i32
  }
  func.func @transform_7(%arg0: i32) -> (i32, i32) {
    %c0_i32 = arith.constant 0 : i32
    %c0_i32_0 = arith.constant 0 : i32
    %c0_i32_1 = arith.constant 0 : i32
    return %c0_i32, %c0_i32_0 : i32, i32
  }
  func.func @transform_8(%arg0: i32) -> (i32, i32) {
    %c0_i32 = arith.constant 0 : i32
    %c0_i32_0 = arith.constant 0 : i32
    return %arg0, %c0_i32 : i32, i32
  }
}

</mosaic_0001>

<llo_original>
// kernel: tpu_custom_call.1
$region0: #{tpu_custom_call.1}
  #allocation0 [shape = 'u32[]', space=smem, size = 0x4, offset = 0x4, fixed_abs, tag = 'smem constant byte address 0x4 - core index']
  #allocation1 [shape = 'u32[144,128]{1,0:T(1,128)}', space=vmem, size = 0x12000, scoped, tag = 'internal scratch']
  #allocation2 [shape = 'bf16[80,128]{1,0:T(8,128)(2,1)}', space=vmem, size = 0x5000, scoped, tag = 'scratch operand']
  #allocation13 [shape = 's32[]', space=sflag, size = 0x4, offset = 0, fixed_abs, tag = 'sflag constant byte address 0x0 - dummy sync flag']
  %s0 = inlined_call_operand.hbm [shape: bf16[5,32,128], index: 0, kind: input, shape index: {}]
  %s1 = inlined_call_operand.hbm [shape: bf16[32,128], index: 1, kind: input, shape index: {}]
  %s2 = inlined_call_operand.hbm [shape: bf16[128,128], index: 2, kind: input, shape index: {}]
  %s3 = inlined_call_operand.hbm [shape: bf16[16,128], index: 3, kind: input, shape index: {}]
  %s4 = inlined_call_operand.vmem [shape: f32[1,128], index: 4, kind: input, shape index: {}]
  %s5 = inlined_call_operand.vmem [shape: bf16[16,128], index: 5, kind: input, shape index: {}]
  %s6 = inlined_call_operand.hbm [shape: bf16[128,128], index: 6, kind: input, shape index: {}]
  %s7 = inlined_call_operand.vmem [shape: f32[1,128], index: 7, kind: input, shape index: {}]
  %s8 = inlined_call_operand.hbm [shape: bf16[32,128], index: 8, kind: output, shape index: {}]
  %s9 = sld [smem:[#allocation0]]
  $region92: #{tpu_custom_call.1} parent=0
    _
  %s11 = ssub.s32 1, %s9
  %s12 = scalar_select 0, %s11, %s9
  $region1: #{tpu_custom_call.1} parent=0
    #allocation3 [shape = 'u8[40960]{0}', space=vmem, size = 0xa000, scoped, tag = 'input window, operand 0']
    #allocation4 [shape = 's32[2]{0}', space=sflag, size = 0x8, scoped, tag = 'scoped memory for tpu_custom_call.1']
    #allocation5 [shape = 's32[2]{0}', space=sflag, size = 0x8, scoped, tag = 'scoped memory for tpu_custom_call.1']
    #allocation6 [shape = 'u8[8192]{0}', space=vmem, size = 0x2000, scoped, tag = 'input window, operand 1']
    #allocation7 [shape = 's32[2]{0}', space=sflag, size = 0x8, scoped, tag = 'scoped memory for tpu_custom_call.1']
    #allocation8 [shape = 'u8[32768]{0}', space=vmem, size = 0x8000, scoped, tag = 'input window, operand 2, single buffered']
    #allocation9 [shape = 'u8[4096]{0}', space=vmem, size = 0x1000, scoped, tag = 'input window, operand 3, single buffered']
    #allocation10 [shape = 's32[1]{0}', space=sflag, size = 0x4, scoped, tag = 'scoped memory for tpu_custom_call.1']
    #allocation11 [shape = 'u8[32768]{0}', space=vmem, size = 0x8000, scoped, tag = 'input window, operand 6, single buffered']
    #allocation12 [shape = 'u8[8192]{0}', space=vmem, size = 0x2000, scoped, tag = 'output window, operand 0']
    %13 = vsyncpa [#allocation4], 0
    %s14 = scalar_lea.sflag [#allocation4], 1
    %15 = vsyncpa %s14, 0
    %16 = vsyncpa [#allocation7], 0
    %s17 = scalar_lea.sflag [#allocation7], 1
    %18 = vsyncpa %s17, 0
    %19 = vsyncpa [#allocation10], 0
    %20 = vsyncpa [#allocation5], 0
    %s21 = scalar_lea.sflag [#allocation5], 1
    %22 = vsyncpa %s21, 0
    loop: start=0, step=1, limit=4
    $region2: #{tpu_custom_call.1} parent=1 // loop_pre_header
      _
    $region3: #{tpu_custom_call.1} parent=1 // loop_header
      %s24 = sphi 0, %s28
      %p25 = scmp.ge.s32.totalorder %s24, 4
      %s34 = sphi 0, %s36
      %s37 = sphi 0, %s34
      %s38 = sphi 0, %s37
      %s54 = sphi 0, %s38
      %s60 = sphi 0, %s62
      %s63 = sphi 0, %s60
      %s64 = sphi 0, %s63
      %s80 = sphi 0, %s64
      %s84 = sphi 0, %s84
      %s86 = sphi 0, %s84
      %s87 = sphi 0, %s86
      %s101 = sphi 0, %s87
      %s105 = sphi 0, %s105
      %s107 = sphi 0, %s105
      %s108 = sphi 0, %s107
      %s122 = sphi 0, %s108
      %s126 = sphi 0, %s126
      %s128 = sphi 0, %s126
      %s129 = sphi 0, %s128
      %s143 = sphi 0, %s129
      %s147 = sphi 0, %s147
      %s149 = sphi 0, %s147
      %s150 = sphi 0, %s149
      %s164 = sphi 0, %s150
      %s168 = sphi 0, %s168
      %s170 = sphi 0, %s168
      %s171 = sphi 0, %s170
      %s185 = sphi 0, %s171
      %s189 = sphi 0, %s189
      %s191 = sphi 0, %s189
      %s192 = sphi 0, %s191
      %s206 = sphi 0, %s192
      %s212 = sphi 0, %s214
      %s215 = sphi 0, %s212
      %s216 = sphi 0, %s215
      %s232 = sphi 0, %s216
    $region4: #{tpu_custom_call.1} parent=1 // loop_header_branch
      %27 = sbr.rel (%p25) target = $region8
    $region5: #{tpu_custom_call.1} parent=1 // loop_body
      %s29 = ssub.s32 %s24, 1
      %s30 = ssub.s32 %s24, 2
      %s31 = sadd.s32 %s24, 1
      %s32 = ssub.s32 %s24, %s31
      %p33 = scmp.eq.s32.totalorder %s32, 0
      %s35 = sadd.s32 %s34, 1
      %s36 = scalar_select %p33, %s34, %s35
      %p39 = pneg %p33
      %p40 = scmp.eq.s32.totalorder %s24, 1
      %p41 = por %p39, %p40
      %p42 = scmp.ne.s32.totalorder %s34, %s37
      %p43 = scmp.eq.s32.totalorder %s24, 0
      %p44 = por %p42, %p43
      %p45 = scmp.ne.s32.totalorder %s34, %s37
      %p46 = scmp.eq.s32.totalorder %s29, 1
      %p47 = por %p45, %p46
      %p48 = scmp.ne.s32.totalorder %s37, %s38
      %p49 = scmp.eq.s32.totalorder %s29, 0
      %p50 = por %p48, %p49
      %p51 = scmp.ne.s32.totalorder %s37, %s38
      %p52 = scmp.eq.s32.totalorder %s30, 1
      %p53 = por %p51, %p52
      %p55 = scmp.ne.s32.totalorder %s38, %s54
      %p56 = scmp.eq.s32.totalorder %s30, 0
      %p57 = por %p55, %p56
      %s58 = ssub.s32 %s24, %s31
      %p59 = scmp.eq.s32.totalorder %s58, 0
      %s61 = sadd.s32 %s60, 1
      %s62 = scalar_select %p59, %s60, %s61
      %p65 = pneg %p59
      %p66 = scmp.eq.s32.totalorder %s24, 1
      %p67 = por %p65, %p66
      %p68 = scmp.ne.s32.totalorder %s60, %s63
      %p69 = scmp.eq.s32.totalorder %s24, 0
      %p70 = por %p68, %p69
      %p71 = scmp.ne.s32.totalorder %s60, %s63
      %p72 = scmp.eq.s32.totalorder %s29, 1
      %p73 = por %p71, %p72
      %p74 = scmp.ne.s32.totalorder %s63, %s64
      %p75 = scmp.eq.s32.totalorder %s29, 0
      %p76 = por %p74, %p75
      %p77 = scmp.ne.s32.totalorder %s63, %s64
      %p78 = scmp.eq.s32.totalorder %s30, 1
      %p79 = por %p77, %p78
      %p81 = scmp.ne.s32.totalorder %s64, %s80
      %p82 = scmp.eq.s32.totalorder %s30, 0
      %p83 = por %p81, %p82
      %s85 = sadd.s32 %s84, 1
      %p88 = scmp.eq.s32.totalorder %s24, 1
      %p89 = scmp.ne.s32.totalorder %s84, %s86
      %p90 = scmp.eq.s32.totalorder %s24, 0
      %p91 = por %p89, %p90
      %p92 = scmp.ne.s32.totalorder %s84, %s86
      %p93 = scmp.eq.s32.totalorder %s29, 1
      %p94 = por %p92, %p93
      %p95 = scmp.ne.s32.totalorder %s86, %s87
      %p96 = scmp.eq.s32.totalorder %s29, 0
      %p97 = por %p95, %p96
      %p98 = scmp.ne.s32.totalorder %s86, %s87
      %p99 = scmp.eq.s32.totalorder %s30, 1
      %p100 = por %p98, %p99
      %p102 = scmp.ne.s32.totalorder %s87, %s101
      %p103 = scmp.eq.s32.totalorder %s30, 0
      %p104 = por %p102, %p103
      %s106 = sadd.s32 %s105, 1
      %p109 = scmp.eq.s32.totalorder %s24, 1
      %p110 = scmp.ne.s32.totalorder %s105, %s107
      %p111 = scmp.eq.s32.totalorder %s24, 0
      %p112 = por %p110, %p111
      %p113 = scmp.ne.s32.totalorder %s105, %s107
      %p114 = scmp.eq.s32.totalorder %s29, 1
      %p115 = por %p113, %p114
      %p116 = scmp.ne.s32.totalorder %s107, %s108
      %p117 = scmp.eq.s32.totalorder %s29, 0
      %p118 = por %p116, %p117
      %p119 = scmp.ne.s32.totalorder %s107, %s108
      %p120 = scmp.eq.s32.totalorder %s30, 1
      %p121 = por %p119, %p120
      %p123 = scmp.ne.s32.totalorder %s108, %s122
      %p124 = scmp.eq.s32.totalorder %s30, 0
      %p125 = por %p123, %p124
      %s127 = sadd.s32 %s126, 1
      %p130 = scmp.eq.s32.totalorder %s24, 1
      %p131 = scmp.ne.s32.totalorder %s126, %s128
      %p132 = scmp.eq.s32.totalorder %s24, 0
      %p133 = por %p131, %p132
      %p134 = scmp.ne.s32.totalorder %s126, %s128
      %p135 = scmp.eq.s32.totalorder %s29, 1
      %p136 = por %p134, %p135
      %p137 = scmp.ne.s32.totalorder %s128, %s129
      %p138 = scmp.eq.s32.totalorder %s29, 0
      %p139 = por %p137, %p138
      %p140 = scmp.ne.s32.totalorder %s128, %s129
      %p141 = scmp.eq.s32.totalorder %s30, 1
      %p142 = por %p140, %p141
      %p144 = scmp.ne.s32.totalorder %s129, %s143
      %p145 = scmp.eq.s32.totalorder %s30, 0
      %p146 = por %p144, %p145
      %s148 = sadd.s32 %s147, 1
      %p151 = scmp.eq.s32.totalorder %s24, 1
      %p152 = scmp.ne.s32.totalorder %s147, %s149
      %p153 = scmp.eq.s32.totalorder %s24, 0
      %p154 = por %p152, %p153
      %p155 = scmp.ne.s32.totalorder %s147, %s149
      %p156 = scmp.eq.s32.totalorder %s29, 1
      %p157 = por %p155, %p156
      %p158 = scmp.ne.s32.totalorder %s149, %s150
      %p159 = scmp.eq.s32.totalorder %s29, 0
      %p160 = por %p158, %p159
      %p161 = scmp.ne.s32.totalorder %s149, %s150
      %p162 = scmp.eq.s32.totalorder %s30, 1
      %p163 = por %p161, %p162
      %p165 = scmp.ne.s32.totalorder %s150, %s164
      %p166 = scmp.eq.s32.totalorder %s30, 0
      %p167 = por %p165, %p166
      %s169 = sadd.s32 %s168, 1
      %p172 = scmp.eq.s32.totalorder %s24, 1
      %p173 = scmp.ne.s32.totalorder %s168, %s170
      %p174 = scmp.eq.s32.totalorder %s24, 0
      %p175 = por %p173, %p174
      %p176 = scmp.ne.s32.totalorder %s168, %s170
      %p177 = scmp.eq.s32.totalorder %s29, 1
      %p178 = por %p176, %p177
      %p179 = scmp.ne.s32.totalorder %s170, %s171
      %p180 = scmp.eq.s32.totalorder %s29, 0
      %p181 = por %p179, %p180
      %p182 = scmp.ne.s32.totalorder %s170, %s171
      %p183 = scmp.eq.s32.totalorder %s30, 1
      %p184 = por %p182, %p183
      %p186 = scmp.ne.s32.totalorder %s171, %s185
      %p187 = scmp.eq.s32.totalorder %s30, 0
      %p188 = por %p186, %p187
      %s190 = sadd.s32 %s189, 1
      %p193 = scmp.eq.s32.totalorder %s24, 1
      %p194 = scmp.ne.s32.totalorder %s189, %s191
      %p195 = scmp.eq.s32.totalorder %s24, 0
      %p196 = por %p194, %p195
      %p197 = scmp.ne.s32.totalorder %s189, %s191
      %p198 = scmp.eq.s32.totalorder %s29, 1
      %p199 = por %p197, %p198
      %p200 = scmp.ne.s32.totalorder %s191, %s192
      %p201 = scmp.eq.s32.totalorder %s29, 0
      %p202 = por %p200, %p201
      %p203 = scmp.ne.s32.totalorder %s191, %s192
      %p204 = scmp.eq.s32.totalorder %s30, 1
      %p205 = por %p203, %p204
      %p207 = scmp.ne.s32.totalorder %s192, %s206
      %p208 = scmp.eq.s32.totalorder %s30, 0
      %p209 = por %p207, %p208
      %s210 = ssub.s32 %s24, %s31
      %p211 = scmp.eq.s32.totalorder %s210, 0
      %s213 = sadd.s32 %s212, 1
      %s214 = scalar_select %p211, %s212, %s213
      %p217 = pneg %p211
      %p218 = scmp.eq.s32.totalorder %s24, 1
      %p219 = por %p217, %p218
      %p220 = scmp.ne.s32.totalorder %s212, %s215
      %p221 = scmp.eq.s32.totalorder %s24, 0
      %p222 = por %p220, %p221
      %p223 = scmp.ne.s32.totalorder %s212, %s215
      %p224 = scmp.eq.s32.totalorder %s29, 1
      %p225 = por %p223, %p224
      %p226 = scmp.ne.s32.totalorder %s215, %s216
      %p227 = scmp.eq.s32.totalorder %s29, 0
      %p228 = por %p226, %p227
      %p229 = scmp.ne.s32.totalorder %s215, %s216
      %p230 = scmp.eq.s32.totalorder %s30, 1
      %p231 = por %p229, %p230
      %p233 = scmp.ne.s32.totalorder %s216, %s232
      %p234 = scmp.eq.s32.totalorder %s30, 0
      %p235 = por %p233, %p234
      %p236 = scmp.le.s32.totalorder 1, %s24
      %p237 = scmp.lt.s32.totalorder %s24, 3
      %p238 = pnand %p236, %p237
      %p239 = pneg %p238
      // Predicated region
      $region9: #{tpu_custom_call.1} parent=5 // pred_check
        _
      $region10: #{tpu_custom_call.1} parent=5 // pred_check_branch
        %241 = sbr.rel (%p238) target = $region12
      $region11: #{tpu_custom_call.1} parent=5 // pred_region
        %s242 = ssub.s32 %s24, 1
        // Predicated region
        $region13: #{tpu_custom_call.1} parent=11 // pred_check
          %p243 = pneg %p97
        $region14: #{tpu_custom_call.1} parent=11 // pred_check_branch
          %245 = sbr.rel (%p243) target = $region16
        $region15: #{tpu_custom_call.1} parent=11 // pred_region
          %s247 = ssub.s32 1024, 1024
          %248 = vsyncadd [#allocation7], %s247
          %s249 = sshll.u32 [#allocation8], 4
          %s250 = int_to_ptr.vmem [resolvable:$true] %s249
          %255 = dma.hbm_to_vmem [thread:$0]  %s2, 1024, %s250, [#allocation7], 64, 64, 4
        $region16: #{tpu_custom_call.1} parent=11 // pred_fallthru
          _
        // Predicated region
        $region17: #{tpu_custom_call.1} parent=11 // pred_check
          %p256 = pneg %p118
        $region18: #{tpu_custom_call.1} parent=11 // pred_check_branch
          %258 = sbr.rel (%p256) target = $region20
        $region19: #{tpu_custom_call.1} parent=11 // pred_region
          %s260 = ssub.s32 128, 128
          %261 = vsyncadd [#allocation10], %s260
          %s262 = sshll.u32 [#allocation9], 4
          %s263 = int_to_ptr.vmem [resolvable:$true] %s262
          %268 = dma.hbm_to_vmem [thread:$0]  %s3, 128, %s263, [#allocation10], 64, 64, 4
        $region20: #{tpu_custom_call.1} parent=11 // pred_fallthru
          _
        // Predicated region
        $region21: #{tpu_custom_call.1} parent=11 // pred_check
          %p269 = pneg %p139
        $region22: #{tpu_custom_call.1} parent=11 // pred_check_branch
          %271 = sbr.rel (%p269) target = $region24
        $region23: #{tpu_custom_call.1} parent=11 // pred_region
          _
        $region24: #{tpu_custom_call.1} parent=11 // pred_fallthru
          _
        // Predicated region
        $region25: #{tpu_custom_call.1} parent=11 // pred_check
          %p272 = pneg %p160
        $region26: #{tpu_custom_call.1} parent=11 // pred_check_branch
          %274 = sbr.rel (%p272) target = $region28
        $region27: #{tpu_custom_call.1} parent=11 // pred_region
          _
        $region28: #{tpu_custom_call.1} parent=11 // pred_fallthru
          _
        // Predicated region
        $region29: #{tpu_custom_call.1} parent=11 // pred_check
          %p275 = pneg %p181
        $region30: #{tpu_custom_call.1} parent=11 // pred_check_branch
          %277 = sbr.rel (%p275) target = $region32
        $region31: #{tpu_custom_call.1} parent=11 // pred_region
          %s279 = ssub.s32 1024, 1024
          %280 = vsyncadd [#allocation10], %s279
          %s281 = sshll.u32 [#allocation11], 4
          %s282 = int_to_ptr.vmem [resolvable:$true] %s281
          %287 = dma.hbm_to_vmem [thread:$0]  %s6, 1024, %s282, [#allocation10], 64, 64, 4
        $region32: #{tpu_custom_call.1} parent=11 // pred_fallthru
          _
        // Predicated region
        $region33: #{tpu_custom_call.1} parent=11 // pred_check
          %p288 = pneg %p202
        $region34: #{tpu_custom_call.1} parent=11 // pred_check_branch
          %290 = sbr.rel (%p288) target = $region36
        $region35: #{tpu_custom_call.1} parent=11 // pred_region
          _
        $region36: #{tpu_custom_call.1} parent=11 // pred_fallthru
          _
      $region12: #{tpu_custom_call.1} parent=5 // pred_fallthru
        _
      %p291 = scmp.lt.s32.totalorder %s24, 2
      // Predicated region
      $region37: #{tpu_custom_call.1} parent=5 // pred_check
        %p292 = pneg %p291
      $region38: #{tpu_custom_call.1} parent=5 // pred_check_branch
        %294 = sbr.rel (%p292) target = $region40
      $region39: #{tpu_custom_call.1} parent=5 // pred_region
        // Predicated region
        $region41: #{tpu_custom_call.1} parent=39 // pred_check
          %p295 = pneg %p44
        $region42: #{tpu_custom_call.1} parent=39 // pred_check_branch
          %297 = sbr.rel (%p295) target = $region44
        $region43: #{tpu_custom_call.1} parent=39 // pred_region
          #allocation14 [shape = 'u32[6]{0}', space=smem, size = 0x18, scoped, tag = 'DMA stride descriptor']
          %s298 = sand.u32 %s34, 1
          %s299 = scalar_lea.sflag [#allocation4], %s298
          %s300 = sand.u32 %s34, 1
          %s301 = smul.addr %s300, 40
          %s302 = scalar_lea.vmem [#allocation3], %s301
          %s303 = smul.u32 2, %s24
          %s305 = ssub.s32 640, 640
          %306 = vsyncadd %s299, %s305
          %s307 = smul.addr %s303, 64
          %s308 = scalar_lea.hbm %s0, %s307
          %s310 = sshll.u32 1, 14
          %s311 = sxor.u32 4294967295, %s310
          %s313 = sld [smem:[#allocation0]]
          %s314 = sadd.s32 2, %s313
          %s316 = sshll.u32 7, 26
          %s317 = sxor.u32 4294967295, %s316
          %s318 = sand.u32 0, %s317
          %s319 = sshll.u32 %s314, 26
          %s320 = sor.u32 %s318, %s319
          %s321 = sshll.u32 %s302, 4
          %s322 = int_to_ptr.vmem [resolvable:$true] %s321
          %328 = sst [smem:[#allocation14]] 256
          %s329 = scalar_lea.smem [#allocation14], 1
          %330 = sst [smem:[%s329]] 128
          %s331 = scalar_lea.smem [#allocation14], 2
          %332 = sst [smem:[%s331]] 2
          %s333 = scalar_lea.smem [#allocation14], 3
          %334 = sst [smem:[%s333]] 64
          %s335 = scalar_lea.smem [#allocation14], 4
          %336 = sst [smem:[%s335]] 64
          %s337 = scalar_lea.smem [#allocation14], 5
          %338 = sst [smem:[%s337]] 4
          %340 = dma.general %s308, 640, %s322, %s299, 131072, [#allocation14], %s320, 0
        $region44: #{tpu_custom_call.1} parent=39 // pred_fallthru
          _
        // Predicated region
        $region45: #{tpu_custom_call.1} parent=39 // pred_check
          %p341 = pneg %p70
        $region46: #{tpu_custom_call.1} parent=39 // pred_check_branch
          %343 = sbr.rel (%p341) target = $region48
        $region47: #{tpu_custom_call.1} parent=39 // pred_region
          %s344 = sand.u32 %s24, 1
          %s345 = scalar_lea.sflag [#allocation7], %s344
          %s346 = sand.u32 %s60, 1
          %s347 = smul.addr %s346, 8
          %s348 = scalar_lea.vmem [#allocation6], %s347
          %s349 = smul.u32 2, %s24
          %s351 = ssub.s32 128, 128
          %352 = vsyncadd %s345, %s351
          %s353 = smul.addr %s349, 64
          %s354 = scalar_lea.hbm %s1, %s353
          %s355 = sshll.u32 %s348, 4
          %s356 = int_to_ptr.vmem [resolvable:$true] %s355
          %361 = dma.hbm_to_vmem [thread:$0]  %s354, 128, %s356, %s345, 64, 64, 4
        $region48: #{tpu_custom_call.1} parent=39 // pred_fallthru
          _
      $region40: #{tpu_custom_call.1} parent=5 // pred_fallthru
        _
      %p362 = scmp.le.s32.totalorder 1, %s24
      %p363 = scmp.lt.s32.totalorder %s24, 3
      %p364 = pnand %p362, %p363
      %p365 = pneg %p364
      // Predicated region
      $region49: #{tpu_custom_call.1} parent=5 // pred_check
        _
      $region50: #{tpu_custom_call.1} parent=5 // pred_check_branch
        %367 = sbr.rel (%p364) target = $region52
      $region51: #{tpu_custom_call.1} parent=5 // pred_region
        %s368 = ssub.s32 %s24, 1
        %s369 = sand.u32 %s37, 1
        %s370 = scalar_lea.sflag [#allocation4], %s369
        %s371 = sand.u32 %s37, 1
        %s372 = smul.addr %s371, 40
        %s373 = scalar_lea.vmem [#allocation3], %s372
        // Predicated region
        $region53: #{tpu_custom_call.1} parent=51 // pred_check
          %p374 = pneg %p50
        $region54: #{tpu_custom_call.1} parent=51 // pred_check_branch
          %376 = sbr.rel (%p374) target = $region56
        $region55: #{tpu_custom_call.1} parent=51 // pred_region
          %377 = dma.done %s370, 640
        $region56: #{tpu_custom_call.1} parent=51 // pred_fallthru
          _
        %s378 = sand.u32 %s29, 1
        %s379 = scalar_lea.sflag [#allocation7], %s378
        %s380 = sand.u32 %s63, 1
        %s381 = smul.addr %s380, 8
        %s382 = scalar_lea.vmem [#allocation6], %s381
        // Predicated region
        $region57: #{tpu_custom_call.1} parent=51 // pred_check
          %p383 = pneg %p76
        $region58: #{tpu_custom_call.1} parent=51 // pred_check_branch
          %385 = sbr.rel (%p383) target = $region60
        $region59: #{tpu_custom_call.1} parent=51 // pred_region
          %386 = dma.done %s379, 128
        $region60: #{tpu_custom_call.1} parent=51 // pred_fallthru
          _
        // Predicated region
        $region61: #{tpu_custom_call.1} parent=51 // pred_check
          %p387 = pneg %p97
        $region62: #{tpu_custom_call.1} parent=51 // pred_check_branch
          %389 = sbr.rel (%p387) target = $region64
        $region63: #{tpu_custom_call.1} parent=51 // pred_region
          %390 = dma.done [#allocation7], 1024
        $region64: #{tpu_custom_call.1} parent=51 // pred_fallthru
          _
        // Predicated region
        $region65: #{tpu_custom_call.1} parent=51 // pred_check
          %p391 = pneg %p118
        $region66: #{tpu_custom_call.1} parent=51 // pred_check_branch
          %393 = sbr.rel (%p391) target = $region68
        $region67: #{tpu_custom_call.1} parent=51 // pred_region
          %394 = dma.done [#allocation10], 128
        $region68: #{tpu_custom_call.1} parent=51 // pred_fallthru
          _
        // Predicated region
        $region69: #{tpu_custom_call.1} parent=51 // pred_check
          %p395 = pneg %p181
        $region70: #{tpu_custom_call.1} parent=51 // pred_check_branch
          %397 = sbr.rel (%p395) target = $region72
        $region71: #{tpu_custom_call.1} parent=51 // pred_region
          %398 = dma.done [#allocation10], 1024
        $region72: #{tpu_custom_call.1} parent=51 // pred_fallthru
          _
        %s399 = sand.u32 %s37, 1
        %s400 = scalar_lea.sflag [#allocation4], %s399
        %s401 = sand.u32 %s37, 1
        %s402 = smul.addr %s401, 40
        %s403 = scalar_lea.vmem [#allocation3], %s402
        %p404 = pneg %p50
        %p405 = pneg %p47
        %s406 = sand.u32 %s29, 1
        %s407 = scalar_lea.sflag [#allocation7], %s406
        %s408 = sand.u32 %s63, 1
        %s409 = smul.addr %s408, 8
        %s410 = scalar_lea.vmem [#allocation6], %s409
        %p411 = pneg %p76
        %p412 = pneg %p73
        %p413 = pneg %p97
        %p414 = pneg %p94
        %p415 = pneg %p118
        %p416 = pneg %p115
        %p417 = pneg %p139
        %p418 = pneg %p136
        %p419 = pneg %p160
        %p420 = pneg %p157
        %p421 = pneg %p181
        %p422 = pneg %p178
        %p423 = pneg %p202
        %p424 = pneg %p199
        %p425 = pneg %p228
        %p426 = pneg %p225
        %s427 = sand.u32 %s215, 1
        %s428 = scalar_lea.sflag [#allocation5], %s427
        %s429 = sand.u32 %s215, 1
        %s430 = smul.addr %s429, 8
        %s431 = scalar_lea.vmem [#allocation12], %s430
        %s432 = smul.u32 2, %s29
        %s433 = smul.u32 2, %s29
        %s434 = smul.u32 2, %s29
        %v436 = vld [vmem:[%s373] sm:$0xf]
        %v437 = vld [vmem:[%s373 + $0x4] sm:$0xf]
        %v438 = vld [vmem:[%s373 + $0x8] sm:$0xf]
        %v439 = vld [vmem:[%s373 + $0xc] sm:$0xf]
        %v440 = vld [vmem:[%s373 + $0x10] sm:$0xf]
        %v441 = vld [vmem:[%s373 + $0x14] sm:$0xf]
        %v442 = vld [vmem:[%s373 + $0x18] sm:$0xf]
        %v443 = vld [vmem:[%s373 + $0x1c] sm:$0xf]
        %v444 = vld [vmem:[%s373 + $0x20] sm:$0xf]
        %v445 = vld [vmem:[%s373 + $0x24] sm:$0xf]
        %v446 = vld [vmem:[#allocation8] sm:$0xf]
        %v447 = vld [vmem:[#allocation8 + $0x4] sm:$0xf]
        %v448 = vld [vmem:[#allocation8 + $0x8] sm:$0xf]
        %v449 = vld [vmem:[#allocation8 + $0xc] sm:$0xf]
        %v450 = vld [vmem:[#allocation8 + $0x10] sm:$0xf]
        %v451 = vld [vmem:[#allocation8 + $0x14] sm:$0xf]
        %v452 = vld [vmem:[#allocation8 + $0x18] sm:$0xf]
        %v453 = vld [vmem:[#allocation8 + $0x1c] sm:$0xf]
        %v454 = vld [vmem:[#allocation8 + $0x20] sm:$0xf]
        %v455 = vld [vmem:[#allocation8 + $0x24] sm:$0xf]
        %v456 = vld [vmem:[#allocation8 + $0x28] sm:$0xf]
        %v457 = vld [vmem:[#allocation8 + $0x2c] sm:$0xf]
        %v458 = vld [vmem:[#allocation8 + $0x30] sm:$0xf]
        %v459 = vld [vmem:[#allocation8 + $0x34] sm:$0xf]
        %v460 = vld [vmem:[#allocation8 + $0x38] sm:$0xf]
        %v461 = vld [vmem:[#allocation8 + $0x3c] sm:$0xf]
        %v462 = vld [vmem:[%s4] sm:$0x1]
        %v464 = vlaneseq
        %v465 = vshrl.u32 %v464, 7
        %v466 = vsub.s32 0, %v465
        %v467 = vrot.slane %v462, %v466
        %v479 = vunpack.c.l.b16 %v436
        %v480 = vunpack.c.l.b16 %v437
        %v481 = vunpack.c.l.b16 %v438
        %v482 = vunpack.c.l.b16 %v439
        %v483 = vunpack.c.l.b16 %v440
        %v484 = vunpack.c.l.b16 %v441
        %v485 = vunpack.c.l.b16 %v442
        %v486 = vunpack.c.l.b16 %v443
        %v487 = vunpack.c.l.b16 %v444
        %v488 = vunpack.c.l.b16 %v445
        %v489 = vpack.c.b16 %v480, %v479
        %v490 = vpack.c.b16 %v482, %v481
        %v491 = vpack.c.b16 %v484, %v483
        %v492 = vpack.c.b16 %v486, %v485
        %v493 = vpack.c.b16 %v488, %v487
        %v515 = vunpack.c.l.b16 %v446
        %v516 = vunpack.c.l.b16 %v447
        %v517 = vunpack.c.l.b16 %v448
        %v518 = vunpack.c.l.b16 %v449
        %v519 = vunpack.c.l.b16 %v450
        %v520 = vunpack.c.l.b16 %v451
        %v521 = vunpack.c.l.b16 %v452
        %v522 = vunpack.c.l.b16 %v453
        %v523 = vunpack.c.l.b16 %v454
        %v524 = vunpack.c.l.b16 %v455
        %v525 = vunpack.c.l.b16 %v456
        %v526 = vunpack.c.l.b16 %v457
        %v527 = vunpack.c.l.b16 %v458
        %v528 = vunpack.c.l.b16 %v459
        %v529 = vunpack.c.l.b16 %v460
        %v530 = vunpack.c.l.b16 %v461
        %v531 = vpack.c.b16 %v516, %v515
        %v532 = vpack.c.b16 %v518, %v517
        %v533 = vpack.c.b16 %v520, %v519
        %v534 = vpack.c.b16 %v522, %v521
        %v535 = vpack.c.b16 %v524, %v523
        %v536 = vpack.c.b16 %v526, %v525
        %v537 = vpack.c.b16 %v528, %v527
        %v538 = vpack.c.b16 %v530, %v529
        %547 = vmatprep.subr.bf16.mxu0 0
        %548 = vmatpush1.bf16.msra.mxu0 %v538
        %549 = vmatprep.subr.bf16.mxu0 0
        %550 = vmatpush1.bf16.msra.mxu0 %v537
        %551 = vmatprep.subr.bf16.mxu0 0
        %552 = vmatpush1.bf16.msra.mxu0 %v536
        %553 = vmatprep.subr.bf16.mxu0 0
        %554 = vmatpush1.bf16.msra.mxu0 %v535
        %555 = vmatprep.subr.bf16.mxu0 0
        %556 = vmatpush1.bf16.msra.mxu0 %v534
        %557 = vmatprep.subr.bf16.mxu0 0
        %558 = vmatpush1.bf16.msra.mxu0 %v533
        %559 = vmatprep.subr.bf16.mxu0 0
        %560 = vmatpush1.bf16.msra.mxu0 %v532
        %561 = vmatprep.subr.bf16.mxu0 0
        %562 = vmatpush1.bf16.msra.mxu0 %v531
        %563 = vmatprep.subr.bf16.mxu0 0
        %564 = vmatpush2.bf16.msra.mxu0 0
        %565 = vmatprep.subr.bf16.mxu0 0
        %566 = vmatpush2.bf16.msra.mxu0 0
        %567 = vmatprep.subr.bf16.mxu0 0
        %568 = vmatpush2.bf16.msra.mxu0 0
        %569 = vmatprep.subr.bf16.mxu0 0
        %570 = vmatpush2.bf16.msra.mxu0 0
        %571 = vmatprep.subr.bf16.mxu0 0
        %572 = vmatpush2.bf16.msra.mxu0 0
        %573 = vmatprep.subr.bf16.mxu0 0
        %574 = vmatpush2.bf16.msra.mxu0 0
        %575 = vmatprep.subr.bf16.mxu0 0
        %576 = vmatpush2.bf16.msra.mxu0 0
        %577 = vmatprep.subr.bf16.mxu0 0
        %578 = vmatpush2.bf16.msra.mxu0 0
        %579 = vmatprep.mubr.bf16.mxu0 0
        %580 = vmatmul.mubr.bf16.gmra.mxu0 %v489
        %v581 = vpop.f32.mrf.mxu0
        %v582 = vadd.f32 %v467, %v581
        %v583 = vpop.f32.mrf.mxu0
        %v584 = vpop.f32.mrf.mxu0
        %v585 = vadd.f32 %v467, %v584
        %v586 = vpop.f32.mrf.mxu0
        %587 = vmatprep.mubr.bf16.mxu0 0
        %588 = vmatmul.mubr.bf16.gmra.mxu0 %v490
        %v589 = vpop.f32.mrf.mxu0
        %v590 = vadd.f32 %v467, %v589
        %v591 = vpop.f32.mrf.mxu0
        %v592 = vpop.f32.mrf.mxu0
        %v593 = vadd.f32 %v467, %v592
        %v594 = vpop.f32.mrf.mxu0
        %595 = vmatprep.mubr.bf16.mxu0 0
        %596 = vmatmul.mubr.bf16.gmra.mxu0 %v491
        %v597 = vpop.f32.mrf.mxu0
        %v598 = vadd.f32 %v467, %v597
        %v599 = vpop.f32.mrf.mxu0
        %v600 = vpop.f32.mrf.mxu0
        %v601 = vadd.f32 %v467, %v600
        %v602 = vpop.f32.mrf.mxu0
        %603 = vmatprep.mubr.bf16.mxu0 0
        %604 = vmatmul.mubr.bf16.gmra.mxu0 %v492
        %v605 = vpop.f32.mrf.mxu0
        %v606 = vadd.f32 %v467, %v605
        %v607 = vpop.f32.mrf.mxu0
        %v608 = vpop.f32.mrf.mxu0
        %v609 = vadd.f32 %v467, %v608
        %v610 = vpop.f32.mrf.mxu0
        %611 = vmatprep.mubr.bf16.mxu0 0
        %612 = vmatmul.mubr.bf16.gmra.mxu0 %v493
        %v613 = vpop.f32.mrf.mxu0
        %v614 = vadd.f32 %v467, %v613
        %v615 = vpop.f32.mrf.mxu0
        %v616 = vpop.f32.mrf.mxu0
        %v617 = vadd.f32 %v467, %v616
        %v618 = vpop.f32.mrf.mxu0
        %619 = vdwg.mxu0
        %v620 = vpack.c.bf16 %v585, %v582
        %v621 = vpack.c.bf16 %v593, %v590
        %v622 = vpack.c.bf16 %v601, %v598
        %v623 = vpack.c.bf16 %v609, %v606
        %v624 = vpack.c.bf16 %v617, %v614
        %v630 = vunpack.c.l.b16 %v620
        %v631 = vunpack.c.h.b16 %v620
        %v632 = vunpack.c.l.b16 %v621
        %v633 = vunpack.c.h.b16 %v621
        %v634 = vunpack.c.l.b16 %v622
        %v635 = vunpack.c.h.b16 %v622
        %v636 = vunpack.c.l.b16 %v623
        %v637 = vunpack.c.h.b16 %v623
        %v638 = vunpack.c.l.b16 %v624
        %v639 = vunpack.c.h.b16 %v624
        %v640 = vpack.c.b16 %v630, %v630
        %v641 = vpack.c.b16 %v631, %v631
        %v642 = vpack.c.b16 %v632, %v632
        %v643 = vpack.c.b16 %v633, %v633
        %v644 = vpack.c.b16 %v634, %v634
        %v645 = vpack.c.b16 %v635, %v635
        %v646 = vpack.c.b16 %v636, %v636
        %v647 = vpack.c.b16 %v637, %v637
        %v648 = vpack.c.b16 %v638, %v638
        %v649 = vpack.c.b16 %v639, %v639
        %660 = vst [vmem:[#allocation2] sm:$0xf] %v640
        %661 = vst [vmem:[#allocation2 + $0x4] sm:$0xf] %v641
        %662 = vst [vmem:[#allocation2 + $0x8] sm:$0xf] %v642
        %663 = vst [vmem:[#allocation2 + $0xc] sm:$0xf] %v643
        %664 = vst [vmem:[#allocation2 + $0x10] sm:$0xf] %v644
        %665 = vst [vmem:[#allocation2 + $0x14] sm:$0xf] %v645
        %666 = vst [vmem:[#allocation2 + $0x18] sm:$0xf] %v646
        %667 = vst [vmem:[#allocation2 + $0x1c] sm:$0xf] %v647
        %668 = vst [vmem:[#allocation2 + $0x20] sm:$0xf] %v648
        %669 = vst [vmem:[#allocation2 + $0x24] sm:$0xf] %v649
        loop: start=0, step=1, limit=5
        $region73: #{tpu_custom_call.1} parent=51 // loop_pre_header
          _
        $region74: #{tpu_custom_call.1} parent=51 // loop_header
          %s671 = sphi 0, %s675
          %p672 = scmp.ge.s32.totalorder %s671, 5
          %v676 = vphi 0.0, %v790
          %v677 = vphi 0.0, %v791
          %v678 = vphi 0.0, %v778
          %v679 = vphi 0.0, %v779
        $region75: #{tpu_custom_call.1} parent=51 // loop_header_branch
          %674 = sbr.rel (%p672) target = $region79
        $region76: #{tpu_custom_call.1} parent=51 // loop_body
          %s680 = smul.u32 %s671, 16
          %s681 = sshra.s32 %s680, 3
          %s682 = sand.u32 %s680, 7
          %s683 = smul.addr %s681, 4
          %s684 = scalar_lea.vmem [#allocation2], %s683
          %v685 = vld [vmem:[%s684] sm:$0xf]
          %v686 = vld [vmem:[%s684 + $0x4] sm:$0xf]
          %v687 = vunpack.c.l.bf16 %v685
          %v688 = vunpack.c.l.bf16 %v686
          %v689 = vpack.c.bf16 %v677, %v676
          %v690 = vld [vmem:[#allocation9] sm:$0xf]
          %v691 = vld [vmem:[#allocation9 + $0x4] sm:$0xf]
          %693 = vrot.lane.b32.xlu0 %v689, 80
          %v694 = vpop.permute.xlu0 %693
          %v697 = vunpack.c.l.b16 %v690
          %v698 = vunpack.c.l.b16 %v691
          %v699 = vpack.c.b16 %v698, %v697
          %vm701 = vcmask 130048
          %v703 = vsel %vm701, %v694, 0
          %705 = vmatprep.subr.bf16.mxu0 0
          %706 = vmatpush1.bf16.msra.mxu0 0
          %707 = vmatprep.subr.bf16.mxu0 0
          %708 = vmatpush1.bf16.msra.mxu0 0
          %709 = vmatprep.subr.bf16.mxu0 0
          %710 = vmatpush1.bf16.msra.mxu0 0
          %711 = vmatprep.subr.bf16.mxu0 0
          %712 = vmatpush1.bf16.msra.mxu0 0
          %713 = vmatprep.subr.bf16.mxu0 0
          %714 = vmatpush1.bf16.msra.mxu0 0
          %715 = vmatprep.subr.bf16.mxu0 0
          %716 = vmatpush1.bf16.msra.mxu0 0
          %717 = vmatprep.subr.bf16.mxu0 0
          %718 = vmatpush1.bf16.msra.mxu0 0
          %719 = vmatprep.subr.bf16.mxu0 0
          %720 = vmatpush1.bf16.msra.mxu0 %v699
          %721 = vmatprep.subr.bf16.mxu0 0
          %722 = vmatpush2.bf16.msra.mxu0 0
          %723 = vmatprep.subr.bf16.mxu0 0
          %724 = vmatpush2.bf16.msra.mxu0 0
          %725 = vmatprep.subr.bf16.mxu0 0
          %726 = vmatpush2.bf16.msra.mxu0 0
          %727 = vmatprep.subr.bf16.mxu0 0
          %728 = vmatpush2.bf16.msra.mxu0 0
          %729 = vmatprep.subr.bf16.mxu0 0
          %730 = vmatpush2.bf16.msra.mxu0 0
          %731 = vmatprep.subr.bf16.mxu0 0
          %732 = vmatpush2.bf16.msra.mxu0 0
          %733 = vmatprep.subr.bf16.mxu0 0
          %734 = vmatpush2.bf16.msra.mxu0 0
          %735 = vmatprep.subr.bf16.mxu0 0
          %736 = vmatpush2.bf16.msra.mxu0 0
          %737 = vmatprep.mubr.bf16.mxu0 0
          %738 = vmatmul.mubr.bf16.gmra.mxu0 %v703
          %v739 = vpop.f32.mrf.mxu0
          %v740 = vadd.f32 0.0, %v739
          %v741 = vpop.f32.mrf.mxu0
          %v742 = vpop.f32.mrf.mxu0
          %v743 = vadd.f32 0.0, %v742
          %v744 = vpop.f32.mrf.mxu0
          %745 = vdwg.mxu0
          %v746 = vadd.f32 %v687, %v740
          %v747 = vadd.f32 %v688, %v743
          %v748 = vmul.f32 %v746, 0.5
          %v749 = vmul.f32 %v747, 0.5
          %v750 = vtanh.pop %v748
          %v751 = vtanh.pop %v749
          %v752 = vmul.f32 %v750, 0.5
          %v753 = vmul.f32 %v751, 0.5
          %v754 = vadd.f32 %v752, 0.5
          %v755 = vadd.f32 %v753, 0.5
          %v756 = vtanh.pop %v746
          %v757 = vtanh.pop %v747
          %v758 = vmul.f32 %v754, %v678
          %v759 = vmul.f32 %v755, %v679
          %762 = vrot.lane.b32.xlu0 %v756, 96
          %v763 = vpop.permute.xlu0 %762
          %764 = vrot.lane.b32.xlu0 %v757, 96
          %v765 = vpop.permute.xlu0 %764
          %v768 = vmul.f32 %v754, %v763
          %v769 = vmul.f32 %v755, %v765
          %772 = vrot.lane.b32.xlu0 %v768, 16
          %v773 = vpop.permute.xlu0 %772
          %774 = vrot.lane.b32.xlu0 %v769, 16
          %v775 = vpop.permute.xlu0 %774
          %v778 = vadd.f32 %v758, %v773
          %v779 = vadd.f32 %v759, %v775
          %v780 = vtanh.pop %v778
          %v781 = vtanh.pop %v779
          %784 = vrot.lane.b32.xlu0 %v780, 32
          %v785 = vpop.permute.xlu0 %784
          %786 = vrot.lane.b32.xlu0 %v781, 32
          %v787 = vpop.permute.xlu0 %786
          %v790 = vmul.f32 %v754, %v785
          %v791 = vmul.f32 %v755, %v787
        $region77: #{tpu_custom_call.1} parent=51 // loop_footer
          %s675 = sadd.s32 1, %s671
        $region78: #{tpu_custom_call.1} parent=51 // loop_footer_branch
          %670 = sbr.rel target = $region74
        $region79: #{tpu_custom_call.1} parent=51 // loop_exit
          _
        %v792 = vpack.c.bf16 %v677, %v676
        %v793 = vld [vmem:[%s5] sm:$0xf]
        %v794 = vld [vmem:[%s5 + $0x4] sm:$0xf]
        %v795 = vld [vmem:[%s7] sm:$0x1]
        %v797 = vlaneseq
        %v798 = vshrl.u32 %v797, 7
        %v799 = vsub.s32 0, %v798
        %v800 = vrot.slane %v795, %v799
        %803 = vrot.lane.b32.xlu0 %v792, 80
        %v804 = vpop.permute.xlu0 %803
        %v807 = vunpack.c.l.b16 %v793
        %v808 = vunpack.c.l.b16 %v794
        %v809 = vpack.c.b16 %v808, %v807
        %vm811 = vcmask 130048
        %v813 = vsel %vm811, %v804, 0
        %815 = vmatprep.subr.bf16.mxu0 0
        %816 = vmatpush1.bf16.msra.mxu0 0
        %817 = vmatprep.subr.bf16.mxu0 0
        %818 = vmatpush1.bf16.msra.mxu0 0
        %819 = vmatprep.subr.bf16.mxu0 0
        %820 = vmatpush1.bf16.msra.mxu0 0
        %821 = vmatprep.subr.bf16.mxu0 0
        %822 = vmatpush1.bf16.msra.mxu0 0
        %823 = vmatprep.subr.bf16.mxu0 0
        %824 = vmatpush1.bf16.msra.mxu0 0
        %825 = vmatprep.subr.bf16.mxu0 0
        %826 = vmatpush1.bf16.msra.mxu0 0
        %827 = vmatprep.subr.bf16.mxu0 0
        %828 = vmatpush1.bf16.msra.mxu0 0
        %829 = vmatprep.subr.bf16.mxu0 0
        %830 = vmatpush1.bf16.msra.mxu0 %v809
        %831 = vmatprep.subr.bf16.mxu0 0
        %832 = vmatpush2.bf16.msra.mxu0 0
        %833 = vmatprep.subr.bf16.mxu0 0
        %834 = vmatpush2.bf16.msra.mxu0 0
        %835 = vmatprep.subr.bf16.mxu0 0
        %836 = vmatpush2.bf16.msra.mxu0 0
        %837 = vmatprep.subr.bf16.mxu0 0
        %838 = vmatpush2.bf16.msra.mxu0 0
        %839 = vmatprep.subr.bf16.mxu0 0
        %840 = vmatpush2.bf16.msra.mxu0 0
        %841 = vmatprep.subr.bf16.mxu0 0
        %842 = vmatpush2.bf16.msra.mxu0 0
        %843 = vmatprep.subr.bf16.mxu0 0
        %844 = vmatpush2.bf16.msra.mxu0 0
        %845 = vmatprep.subr.bf16.mxu0 0
        %846 = vmatpush2.bf16.msra.mxu0 0
        %847 = vmatprep.mubr.bf16.mxu0 0
        %848 = vmatmul.mubr.bf16.gmra.mxu0 %v813
        %v849 = vpop.f32.mrf.mxu0
        %v850 = vadd.f32 %v800, %v849
        %v851 = vpop.f32.mrf.mxu0
        %v852 = vpop.f32.mrf.mxu0
        %v853 = vadd.f32 %v800, %v852
        %v854 = vpop.f32.mrf.mxu0
        %855 = vdwg.mxu0
        %v856 = vld [vmem:[%s382] sm:$0xf]
        %v857 = vld [vmem:[%s382 + $0x4] sm:$0xf]
        %v858 = vld [vmem:[#allocation11] sm:$0xf]
        %v859 = vld [vmem:[#allocation11 + $0x4] sm:$0xf]
        %v860 = vld [vmem:[#allocation11 + $0x8] sm:$0xf]
        %v861 = vld [vmem:[#allocation11 + $0xc] sm:$0xf]
        %v862 = vld [vmem:[#allocation11 + $0x10] sm:$0xf]
        %v863 = vld [vmem:[#allocation11 + $0x14] sm:$0xf]
        %v864 = vld [vmem:[#allocation11 + $0x18] sm:$0xf]
        %v865 = vld [vmem:[#allocation11 + $0x1c] sm:$0xf]
        %v866 = vld [vmem:[#allocation11 + $0x20] sm:$0xf]
        %v867 = vld [vmem:[#allocation11 + $0x24] sm:$0xf]
        %v868 = vld [vmem:[#allocation11 + $0x28] sm:$0xf]
        %v869 = vld [vmem:[#allocation11 + $0x2c] sm:$0xf]
        %v870 = vld [vmem:[#allocation11 + $0x30] sm:$0xf]
        %v871 = vld [vmem:[#allocation11 + $0x34] sm:$0xf]
        %v872 = vld [vmem:[#allocation11 + $0x38] sm:$0xf]
        %v873 = vld [vmem:[#allocation11 + $0x3c] sm:$0xf]
        %v876 = vunpack.c.l.b16 %v856
        %v877 = vunpack.c.l.b16 %v857
        %v878 = vpack.c.b16 %v877, %v876
        %v896 = vunpack.c.l.b16 %v858
        %v897 = vunpack.c.l.b16 %v859
        %v898 = vunpack.c.l.b16 %v860
        %v899 = vunpack.c.l.b16 %v861
        %v900 = vunpack.c.l.b16 %v862
        %v901 = vunpack.c.l.b16 %v863
        %v902 = vunpack.c.l.b16 %v864
        %v903 = vunpack.c.l.b16 %v865
        %v904 = vunpack.c.l.b16 %v866
        %v905 = vunpack.c.l.b16 %v867
        %v906 = vunpack.c.l.b16 %v868
        %v907 = vunpack.c.l.b16 %v869
        %v908 = vunpack.c.l.b16 %v870
        %v909 = vunpack.c.l.b16 %v871
        %v910 = vunpack.c.l.b16 %v872
        %v911 = vunpack.c.l.b16 %v873
        %v912 = vpack.c.b16 %v897, %v896
        %v913 = vpack.c.b16 %v899, %v898
        %v914 = vpack.c.b16 %v901, %v900
        %v915 = vpack.c.b16 %v903, %v902
        %v916 = vpack.c.b16 %v905, %v904
        %v917 = vpack.c.b16 %v907, %v906
        %v918 = vpack.c.b16 %v909, %v908
        %v919 = vpack.c.b16 %v911, %v910
        %928 = vmatprep.subr.bf16.mxu0 0
        %929 = vmatpush1.bf16.msra.mxu0 %v919
        %930 = vmatprep.subr.bf16.mxu0 0
        %931 = vmatpush1.bf16.msra.mxu0 %v918
        %932 = vmatprep.subr.bf16.mxu0 0
        %933 = vmatpush1.bf16.msra.mxu0 %v917
        %934 = vmatprep.subr.bf16.mxu0 0
        %935 = vmatpush1.bf16.msra.mxu0 %v916
        %936 = vmatprep.subr.bf16.mxu0 0
        %937 = vmatpush1.bf16.msra.mxu0 %v915
        %938 = vmatprep.subr.bf16.mxu0 0
        %939 = vmatpush1.bf16.msra.mxu0 %v914
        %940 = vmatprep.subr.bf16.mxu0 0
        %941 = vmatpush1.bf16.msra.mxu0 %v913
        %942 = vmatprep.subr.bf16.mxu0 0
        %943 = vmatpush1.bf16.msra.mxu0 %v912
        %944 = vmatprep.subr.bf16.mxu0 0
        %945 = vmatpush2.bf16.msra.mxu0 0
        %946 = vmatprep.subr.bf16.mxu0 0
        %947 = vmatpush2.bf16.msra.mxu0 0
        %948 = vmatprep.subr.bf16.mxu0 0
        %949 = vmatpush2.bf16.msra.mxu0 0
        %950 = vmatprep.subr.bf16.mxu0 0
        %951 = vmatpush2.bf16.msra.mxu0 0
        %952 = vmatprep.subr.bf16.mxu0 0
        %953 = vmatpush2.bf16.msra.mxu0 0
        %954 = vmatprep.subr.bf16.mxu0 0
        %955 = vmatpush2.bf16.msra.mxu0 0
        %956 = vmatprep.subr.bf16.mxu0 0
        %957 = vmatpush2.bf16.msra.mxu0 0
        %958 = vmatprep.subr.bf16.mxu0 0
        %959 = vmatpush2.bf16.msra.mxu0 0
        %960 = vmatprep.mubr.bf16.mxu0 0
        %961 = vmatmul.mubr.bf16.gmra.mxu0 %v878
        %v962 = vpop.f32.mrf.mxu0
        %v963 = vadd.f32 0.0, %v962
        %v964 = vpop.f32.mrf.mxu0
        %v965 = vpop.f32.mrf.mxu0
        %v966 = vadd.f32 0.0, %v965
        %v967 = vpop.f32.mrf.mxu0
        %968 = vdwg.mxu0
        %v969 = vadd.f32 %v850, %v963
        %v970 = vadd.f32 %v853, %v966
        %v971 = vmax.f32 %v969, 0.0
        %v972 = vmax.f32 %v970, 0.0
        %v973 = vpack.c.bf16 %v972, %v971
        %v975 = vunpack.c.l.b16 %v973
        %v976 = vunpack.c.h.b16 %v973
        %v977 = vpack.c.b16 %v975, %v975
        %v978 = vpack.c.b16 %v976, %v976
        %981 = vst [vmem:[%s431] sm:$0xf] %v977
        %982 = vst [vmem:[%s431 + $0x4] sm:$0xf] %v978
        %s983 = sand.u32 %s215, 1
        %s984 = scalar_lea.sflag [#allocation5], %s983
        %s985 = sand.u32 %s215, 1
        %s986 = smul.addr %s985, 8
        %s987 = scalar_lea.vmem [#allocation12], %s986
        // Predicated region
        $region80: #{tpu_custom_call.1} parent=51 // pred_check
          %p988 = pneg %p225
        $region81: #{tpu_custom_call.1} parent=51 // pred_check_branch
          %990 = sbr.rel (%p988) target = $region83
        $region82: #{tpu_custom_call.1} parent=51 // pred_region
          %s991 = smul.u32 2, %s29
          %s993 = ssub.s32 128, 128
          %994 = vsyncadd %s984, %s993
          %s995 = smul.addr %s991, 64
          %s996 = scalar_lea.hbm %s8, %s995
          %s997 = sshll.u32 %s987, 4
          %s998 = int_to_ptr.vmem [resolvable:$true] %s997
          %1003 = dma.vmem_to_hbm [thread:$0]  %s998, 128, %s996, %s984, 64, 64, 4
        $region83: #{tpu_custom_call.1} parent=51 // pred_fallthru
          _
      $region52: #{tpu_custom_call.1} parent=5 // pred_fallthru
        _
      %p1004 = scmp.le.s32.totalorder 2, %s24
      // Predicated region
      $region84: #{tpu_custom_call.1} parent=5 // pred_check
        %p1005 = pneg %p1004
      $region85: #{tpu_custom_call.1} parent=5 // pred_check_branch
        %1007 = sbr.rel (%p1005) target = $region87
      $region86: #{tpu_custom_call.1} parent=5 // pred_region
        %s1008 = ssub.s32 %s24, 2
        // Predicated region
        $region88: #{tpu_custom_call.1} parent=86 // pred_check
          %p1009 = pneg %p231
        $region89: #{tpu_custom_call.1} parent=86 // pred_check_branch
          %1011 = sbr.rel (%p1009) target = $region91
        $region90: #{tpu_custom_call.1} parent=86 // pred_region
          %s1012 = sand.u32 %s216, 1
          %s1013 = scalar_lea.sflag [#allocation5], %s1012
          %s1014 = sand.u32 %s216, 1
          %s1015 = smul.addr %s1014, 8
          %s1016 = scalar_lea.vmem [#allocation12], %s1015
          %1017 = dma.done %s1013, 128
        $region91: #{tpu_custom_call.1} parent=86 // pred_fallthru
          _
      $region87: #{tpu_custom_call.1} parent=5 // pred_fallthru
        _
    $region6: #{tpu_custom_call.1} parent=1 // loop_footer
      %s28 = sadd.s32 1, %s24
    $region7: #{tpu_custom_call.1} parent=1 // loop_footer_branch
      %23 = sbr.rel target = $region3
    $region8: #{tpu_custom_call.1} parent=1 // loop_exit
      _
    %1018 = vsyncpa [#allocation4], 1
    %s1019 = scalar_lea.sflag [#allocation4], 1
    %1020 = vsyncpa %s1019, 1
    %1021 = vsyncpa [#allocation7], 1
    %s1022 = scalar_lea.sflag [#allocation7], 1
    %1023 = vsyncpa %s1022, 1
    %1024 = vsyncpa [#allocation10], 1
    %1025 = vsyncpa [#allocation5], 1
    %s1026 = scalar_lea.sflag [#allocation5], 1
    %1027 = vsyncpa %s1026, 1

</llo_original>
